<compile_context>
chip_gen: v5e
topology: v5e:2x2
jax: 0.10.0
libtpu: 0.0.40
codegen_flags: <defaults>
</compile_context>

<pallas_src>
import jax
import jax.numpy as jnp
from jax.experimental import pallas as pl
from jax.experimental.pallas import tpu as pltpu  # noqa: F401  (TPU backend)


# ----------------------------------------------------------------------------
# Single fused kernel: patch embedding + per-video pooling + three scoring
# heads + final sum, one lane-dense (B_pad, 128) output write.
# ----------------------------------------------------------------------------
def _fused_forward_kernel(
    patches_ref,      # [M, K]       bf16  (src tokens then edit tokens)
    pool_src_ref,     # [B_pad, M]   f32   mean-pooling rows for src videos
    pool_edit_ref,    # [B_pad, M]   f32   mean-pooling rows for edit videos
    prompt_ref,       # [B_pad, L, Dt] f32
    w_embed_ref,      # [K, D]       bf16
    b_embed_ref,      # [1, D]       f32
    t_w1_ref, t_b1_ref, t_w2_ref,          # traditional head
    f_w1_ref, f_b1_ref, f_w2_ref,          # fidelity head ([4D, Hm] fused w1)
    x_wt_ref, x_bt_ref, x_w1_ref, x_b1_ref, x_w2_ref,   # text head
    b2_all_ref,       # [1, 128]  last-layer biases packed into lanes 0..3
    o_ref,            # [B_pad, 128] f32 output slab
):
    # ---- shared patch-embedding matmul: all src+edit tokens in one M dim ----
    # bf16 operands, f32 accumulation (MXU-friendly on every generation).
    tok = jnp.dot(patches_ref[...], w_embed_ref[...],
                  preferred_element_type=jnp.float32)            # [M, D] f32

    # Per-video mean pooling as small matmuls (pooling rows sum to 1, so the
    # embedding bias can be added after pooling).
    src_feat = jnp.dot(pool_src_ref[...], tok,
                       preferred_element_type=jnp.float32) + b_embed_ref[...]
    edit_feat = jnp.dot(pool_edit_ref[...], tok,
                        preferred_element_type=jnp.float32) + b_embed_ref[...]

    # ---- traditional (DOVER-like) head: edit features only ----
    h_t = jnp.dot(edit_feat, t_w1_ref[...],
                  preferred_element_type=jnp.float32) + t_b1_ref[...]
    # tanh-approx GELU (PyTorch nn.GELU default is exact erf; close enough for
    # this synthetic stand-in and cheaper on the EUP).
    h_t = jax.nn.gelu(h_t, approximate=True)
    # Degenerate [Hm, 1] matmul -> VPU multiply + lane reduce (MXU stays free).
    t_score = jnp.sum(h_t * t_w2_ref[...], axis=-1, keepdims=True)   # [B_pad,1]

    # ---- fidelity (double-stream) head: no concat, 4 accumulated dots ----
    D = t_w1_ref.shape[0]
    f_w1 = f_w1_ref[...]                                             # [4D, Hm]
    h_f = (jnp.dot(src_feat, f_w1[0 * D:1 * D],
                   preferred_element_type=jnp.float32)
           + jnp.dot(edit_feat, f_w1[1 * D:2 * D],
                     preferred_element_type=jnp.float32)
           + jnp.dot(src_feat - edit_feat, f_w1[2 * D:3 * D],
                     preferred_element_type=jnp.float32)
           + jnp.dot(src_feat * edit_feat, f_w1[3 * D:4 * D],
                     preferred_element_type=jnp.float32)
           + f_b1_ref[...])
    h_f = jax.nn.gelu(h_f, approximate=True)
    f_score = jnp.sum(h_f * f_w2_ref[...], axis=-1, keepdims=True)

    # ---- text (BLIP-like alignment) head: edit features + prompt tokens ----
    p_pooled = jnp.mean(prompt_ref[...], axis=1)                     # [B_pad,Dt]
    t_emb = jnp.dot(p_pooled, x_wt_ref[...],
                    preferred_element_type=jnp.float32) + x_bt_ref[...]
    h_x = jnp.dot(edit_feat * t_emb, x_w1_ref[...],
                  preferred_element_type=jnp.float32) + x_b1_ref[...]
    h_x = jax.nn.gelu(h_x, approximate=True)
    x_score = jnp.sum(h_x * x_w2_ref[...], axis=-1, keepdims=True)

    # ---- lane-dense output slab: one unmasked (B_pad, 128) f32 write ----
    # lane 0: traditional, lane 1: fidelity, lane 2: text, lane 3: total.
    lane = jax.lax.broadcasted_iota(jnp.int32, o_ref.shape, 1)
    out = jnp.where(lane == 0, t_score, 0.0)
    out = out + jnp.where(lane == 1, f_score, 0.0)
    out = out + jnp.where(lane == 2, x_score, 0.0)
    out = out + jnp.where(lane == 3, t_score + f_score + x_score, 0.0)
    o_ref[...] = out + b2_all_ref[...]


# ----------------------------------------------------------------------------
# JAX glue
# ----------------------------------------------------------------------------
def video_to_patches(video, patch):
    """[B, T, C, H, W] -> [B, T*(H/P)*(W/P), C*P*P] (non-overlapping patches)."""
    B, T, C, H, W = video.shape
    P = patch
    x = video.reshape(B, T, C, H // P, P, W // P, P)
    x = x.transpose(0, 1, 3, 5, 2, 4, 6)            # B,T,hP,wP,C,P,P
    return x.reshape(B, T * (H // P) * (W // P), C * P * P)


def make_params(key, K, D, Hm, Dt):
    ks = jax.random.split(key, 16)
    s = 0.02
    p = {}
    # shared patch embedding (fidelity branch reuses it for src & edit)
    p["w_embed"] = s * jax.random.normal(ks[0], (K, D), jnp.float32)
    p["b_embed"] = jnp.zeros((1, D), jnp.float32)
    # traditional (DOVER-like) head
    p["t_w1"] = s * jax.random.normal(ks[1], (D, Hm), jnp.float32)
    p["t_b1"] = jnp.zeros((1, Hm), jnp.float32)
    p["t_w2"] = s * jax.random.normal(ks[2], (1, Hm), jnp.float32)
    # fidelity (double-stream) head; w1 stored as fused [4D, Hm] row blocks
    p["f_w1"] = s * jax.random.normal(ks[3], (4 * D, Hm), jnp.float32)
    p["f_b1"] = jnp.zeros((1, Hm), jnp.float32)
    p["f_w2"] = s * jax.random.normal(ks[4], (1, Hm), jnp.float32)
    # text (BLIP-like alignment) head
    p["x_wt"] = s * jax.random.normal(ks[5], (Dt, D), jnp.float32)
    p["x_bt"] = jnp.zeros((1, D), jnp.float32)
    p["x_w1"] = s * jax.random.normal(ks[6], (D, Hm), jnp.float32)
    p["x_b1"] = jnp.zeros((1, Hm), jnp.float32)
    p["x_w2"] = s * jax.random.normal(ks[7], (1, Hm), jnp.float32)
    # last-layer biases packed lane-dense: lane 0 traditional, 1 fidelity,
    # 2 text, 3 their sum (added directly onto the output slab).
    t_b2 = jnp.zeros((), jnp.float32)
    f_b2 = jnp.zeros((), jnp.float32)
    x_b2 = jnp.zeros((), jnp.float32)
    b2 = jnp.zeros((128,), jnp.float32)
    b2 = b2.at[0].set(t_b2).at[1].set(f_b2).at[2].set(x_b2)
    b2 = b2.at[3].set(t_b2 + f_b2 + x_b2)
    p["b2_all"] = b2[None, :]
    return p


def eval_edit_model_forward(src_video, edit_video, prompt_emb, params, patch):
    B = src_video.shape[0]
    src_patches = video_to_patches(src_video, patch)    # [B, N, K]
    edit_patches = video_to_patches(edit_video, patch)  # [B, N, K]
    _, N, K = src_patches.shape
    M = 2 * B * N                                       # all tokens, one M dim
    B_pad = max(8, ((B + 7) // 8) * 8)                  # sublane-aligned batch

    # src tokens first, then edit tokens; bf16 MXU operands, f32 accumulation.
    patches_all = jnp.concatenate(
        [src_patches.reshape(B * N, K), edit_patches.reshape(B * N, K)],
        axis=0).astype(jnp.bfloat16)

    # Mean-pooling matrices (rows b sum to 1 over that video's token rows).
    vid = jnp.arange(M) // N                            # video id per token row
    sel = (vid[None, :] == jnp.arange(2 * B)[:, None]).astype(jnp.float32) / N
    pad_rows = jnp.zeros((B_pad - B, M), jnp.float32)
    pool_src = jnp.concatenate([sel[:B], pad_rows], axis=0)    # [B_pad, M]
    pool_edit = jnp.concatenate([sel[B:], pad_rows], axis=0)   # [B_pad, M]

    # Pad prompt batch to the sublane-aligned head batch.
    prompt_pad = jnp.zeros((B_pad,) + prompt_emb.shape[1:],
                           prompt_emb.dtype).at[:B].set(prompt_emb)

    scores = pl.pallas_call(
        _fused_forward_kernel,
        out_shape=jax.ShapeDtypeStruct((B_pad, 128), jnp.float32),
    )(
        patches_all, pool_src, pool_edit, prompt_pad,
        params["w_embed"].astype(jnp.bfloat16), params["b_embed"],
        params["t_w1"], params["t_b1"], params["t_w2"],
        params["f_w1"], params["f_b1"], params["f_w2"],
        params["x_wt"], params["x_bt"],
        params["x_w1"], params["x_b1"], params["x_w2"],
        params["b2_all"],
    )

    # forward(): traditional + fidelity[0] + text[0] -> .item() (per-call
    # scalar).  Lane 3 of row 0 already holds that sum for batch element 0.
    return scores[0, 3]


if __name__ == "__main__":
    # Small shapes consistent with the module: videos [B, T, C, H, W],
    # prompt as pre-embedded tokens [B, L, Dt].
    B, T, C, H, W = 2, 4, 4, 16, 16
    P = 8                       # patch size -> N = T * (H/P) * (W/P) = 16
    K = C * P * P               # 256 (lane-aligned)
    D, Hm = 128, 128            # feature / hidden widths (lane-aligned)
    L, Dt = 8, 128              # prompt tokens / text embedding dim

    key = jax.random.PRNGKey(0)
    k_src, k_edit, k_prompt, k_param = jax.random.split(key, 4)
    src_video = jax.random.normal(k_src, (B, T, C, H, W), jnp.float32)
    edit_video = jax.random.normal(k_edit, (B, T, C, H, W), jnp.float32)
    prompt_emb = jax.random.normal(k_prompt, (B, L, Dt), jnp.float32)
    params = make_params(k_param, K, D, Hm, Dt)

    score = jax.jit(
        lambda s, e, p: eval_edit_model_forward(s, e, p, params, P)
    )(src_video, edit_video, prompt_emb)
    jax.block_until_ready(score)
    _ = float(score)            # mirrors .item()
    print("KERNEL_OK")
</pallas_src>

<mosaic_0001>
module attributes {stable_mosaic.version = 11 : i64} {
  func.func @_fused_forward_kernel(%arg0: memref<64x256xbf16, #tpu.memory_space<vmem>>, %arg1: memref<8x64xf32, #tpu.memory_space<vmem>>, %arg2: memref<8x64xf32, #tpu.memory_space<vmem>>, %arg3: memref<8x8x128xf32, #tpu.memory_space<vmem>>, %arg4: memref<256x128xbf16, #tpu.memory_space<vmem>>, %arg5: memref<1x128xf32, #tpu.memory_space<vmem>>, %arg6: memref<128x128xf32, #tpu.memory_space<vmem>>, %arg7: memref<1x128xf32, #tpu.memory_space<vmem>>, %arg8: memref<1x128xf32, #tpu.memory_space<vmem>>, %arg9: memref<512x128xf32, #tpu.memory_space<vmem>>, %arg10: memref<1x128xf32, #tpu.memory_space<vmem>>, %arg11: memref<1x128xf32, #tpu.memory_space<vmem>>, %arg12: memref<128x128xf32, #tpu.memory_space<vmem>>, %arg13: memref<1x128xf32, #tpu.memory_space<vmem>>, %arg14: memref<128x128xf32, #tpu.memory_space<vmem>>, %arg15: memref<1x128xf32, #tpu.memory_space<vmem>>, %arg16: memref<1x128xf32, #tpu.memory_space<vmem>>, %arg17: memref<1x128xf32, #tpu.memory_space<vmem>>, %arg18: memref<8x128xf32, #tpu.memory_space<vmem>>) attributes {dimension_semantics = [], scalar_prefetch = 0 : i64, scratch_operands = 0 : i64, tpu.core_type = #tpu.core_type<tc>} {
    %c0 = arith.constant 0 : index
    %c0_0 = arith.constant 0 : index
    %0 = vector.load %arg0[%c0, %c0_0] : memref<64x256xbf16, #tpu.memory_space<vmem>>, vector<64x256xbf16>
    %c0_1 = arith.constant 0 : index
    %c0_2 = arith.constant 0 : index
    %1 = vector.load %arg4[%c0_1, %c0_2] : memref<256x128xbf16, #tpu.memory_space<vmem>>, vector<256x128xbf16>
    %cst = arith.constant dense<0.000000e+00> : vector<64x128xf32>
    %2 = tpu.matmul %0, %1, %cst {dimension_numbers = #tpu.dot_dimension_numbers<[1], [0], [0], [1], [0, 0, 1, 1], [], []>} : vector<64x256xbf16>, vector<256x128xbf16>, vector<64x128xf32> -> vector<64x128xf32>
    %c0_3 = arith.constant 0 : index
    %c0_4 = arith.constant 0 : index
    %3 = vector.load %arg1[%c0_3, %c0_4] : memref<8x64xf32, #tpu.memory_space<vmem>>, vector<8x64xf32>
    %cst_5 = arith.constant dense<0.000000e+00> : vector<8x128xf32>
    %4 = tpu.matmul %3, %2, %cst_5 {dimension_numbers = #tpu.dot_dimension_numbers<[1], [0], [0], [1], [0, 0, 1, 1], [], []>} : vector<8x64xf32>, vector<64x128xf32>, vector<8x128xf32> -> vector<8x128xf32>
    %c0_6 = arith.constant 0 : index
    %c0_7 = arith.constant 0 : index
    %5 = vector.load %arg5[%c0_6, %c0_7] : memref<1x128xf32, #tpu.memory_space<vmem>>, vector<1x128xf32>
    %6 = vector.broadcast %5 : vector<1x128xf32> to vector<8x128xf32>
    %7 = arith.addf %4, %6 : vector<8x128xf32>
    %c0_8 = arith.constant 0 : index
    %c0_9 = arith.constant 0 : index
    %8 = vector.load %arg2[%c0_8, %c0_9] : memref<8x64xf32, #tpu.memory_space<vmem>>, vector<8x64xf32>
    %cst_10 = arith.constant dense<0.000000e+00> : vector<8x128xf32>
    %9 = tpu.matmul %8, %2, %cst_10 {dimension_numbers = #tpu.dot_dimension_numbers<[1], [0], [0], [1], [0, 0, 1, 1], [], []>} : vector<8x64xf32>, vector<64x128xf32>, vector<8x128xf32> -> vector<8x128xf32>
    %c0_11 = arith.constant 0 : index
    %c0_12 = arith.constant 0 : index
    %10 = vector.load %arg5[%c0_11, %c0_12] : memref<1x128xf32, #tpu.memory_space<vmem>>, vector<1x128xf32>
    %11 = vector.broadcast %10 : vector<1x128xf32> to vector<8x128xf32>
    %12 = arith.addf %9, %11 : vector<8x128xf32>
    %c0_13 = arith.constant 0 : index
    %c0_14 = arith.constant 0 : index
    %13 = vector.load %arg6[%c0_13, %c0_14] : memref<128x128xf32, #tpu.memory_space<vmem>>, vector<128x128xf32>
    %cst_15 = arith.constant dense<0.000000e+00> : vector<8x128xf32>
    %14 = tpu.matmul %12, %13, %cst_15 {dimension_numbers = #tpu.dot_dimension_numbers<[1], [0], [0], [1], [0, 0, 1, 1], [], []>} : vector<8x128xf32>, vector<128x128xf32>, vector<8x128xf32> -> vector<8x128xf32>
    %c0_16 = arith.constant 0 : index
    %c0_17 = arith.constant 0 : index
    %15 = vector.load %arg7[%c0_16, %c0_17] : memref<1x128xf32, #tpu.memory_space<vmem>>, vector<1x128xf32>
    %16 = vector.broadcast %15 : vector<1x128xf32> to vector<8x128xf32>
    %17 = arith.addf %14, %16 : vector<8x128xf32>
    %18 = arith.mulf %17, %17 : vector<8x128xf32>
    %19 = arith.mulf %17, %18 : vector<8x128xf32>
    %cst_18 = arith.constant 4.471500e-02 : f32
    %20 = vector.broadcast %cst_18 : f32 to vector<8x128xf32>
    %21 = arith.mulf %20, %19 : vector<8x128xf32>
    %22 = arith.addf %17, %21 : vector<8x128xf32>
    %cst_19 = arith.constant 0.797884583 : f32
    %23 = vector.broadcast %cst_19 : f32 to vector<8x128xf32>
    %24 = arith.mulf %23, %22 : vector<8x128xf32>
    %25 = math.tanh %24 : vector<8x128xf32>
    %cst_20 = arith.constant 1.000000e+00 : f32
    %26 = vector.broadcast %cst_20 : f32 to vector<8x128xf32>
    %27 = arith.addf %26, %25 : vector<8x128xf32>
    %cst_21 = arith.constant 5.000000e-01 : f32
    %28 = vector.broadcast %cst_21 : f32 to vector<8x128xf32>
    %29 = arith.mulf %28, %27 : vector<8x128xf32>
    %30 = arith.mulf %17, %29 : vector<8x128xf32>
    %c0_22 = arith.constant 0 : index
    %c0_23 = arith.constant 0 : index
    %31 = vector.load %arg8[%c0_22, %c0_23] : memref<1x128xf32, #tpu.memory_space<vmem>>, vector<1x128xf32>
    %32 = vector.broadcast %31 : vector<1x128xf32> to vector<8x128xf32>
    %33 = arith.mulf %30, %32 : vector<8x128xf32>
    %cst_24 = arith.constant dense<0.000000e+00> : vector<8xf32>
    %34 = vector.multi_reduction <add>, %33, %cst_24 [1] : vector<8x128xf32> to vector<8xf32>
    %35 = vector.shape_cast %34 : vector<8xf32> to vector<8x1xf32>
    %c0_25 = arith.constant 0 : index
    %c0_26 = arith.constant 0 : index
    %36 = vector.load %arg9[%c0_25, %c0_26] : memref<512x128xf32, #tpu.memory_space<vmem>>, vector<512x128xf32>
    %37 = vector.extract_strided_slice %36 {offsets = [0, 0], sizes = [128, 128], strides = [1, 1]} : vector<512x128xf32> to vector<128x128xf32>
    %cst_27 = arith.constant dense<0.000000e+00> : vector<8x128xf32>
    %38 = tpu.matmul %7, %37, %cst_27 {dimension_numbers = #tpu.dot_dimension_numbers<[1], [0], [0], [1], [0, 0, 1, 1], [], []>} : vector<8x128xf32>, vector<128x128xf32>, vector<8x128xf32> -> vector<8x128xf32>
    %39 = vector.extract_strided_slice %36 {offsets = [128, 0], sizes = [128, 128], strides = [1, 1]} : vector<512x128xf32> to vector<128x128xf32>
    %cst_28 = arith.constant dense<0.000000e+00> : vector<8x128xf32>
    %40 = tpu.matmul %12, %39, %cst_28 {dimension_numbers = #tpu.dot_dimension_numbers<[1], [0], [0], [1], [0, 0, 1, 1], [], []>} : vector<8x128xf32>, vector<128x128xf32>, vector<8x128xf32> -> vector<8x128xf32>
    %41 = arith.addf %38, %40 : vector<8x128xf32>
    %42 = arith.subf %7, %12 : vector<8x128xf32>
    %43 = vector.extract_strided_slice %36 {offsets = [256, 0], sizes = [128, 128], strides = [1, 1]} : vector<512x128xf32> to vector<128x128xf32>
    %cst_29 = arith.constant dense<0.000000e+00> : vector<8x128xf32>
    %44 = tpu.matmul %42, %43, %cst_29 {dimension_numbers = #tpu.dot_dimension_numbers<[1], [0], [0], [1], [0, 0, 1, 1], [], []>} : vector<8x128xf32>, vector<128x128xf32>, vector<8x128xf32> -> vector<8x128xf32>
    %45 = arith.addf %41, %44 : vector<8x128xf32>
    %46 = arith.mulf %7, %12 : vector<8x128xf32>
    %47 = vector.extract_strided_slice %36 {offsets = [384, 0], sizes = [128, 128], strides = [1, 1]} : vector<512x128xf32> to vector<128x128xf32>
    %cst_30 = arith.constant dense<0.000000e+00> : vector<8x128xf32>
    %48 = tpu.matmul %46, %47, %cst_30 {dimension_numbers = #tpu.dot_dimension_numbers<[1], [0], [0], [1], [0, 0, 1, 1], [], []>} : vector<8x128xf32>, vector<128x128xf32>, vector<8x128xf32> -> vector<8x128xf32>
    %49 = arith.addf %45, %48 : vector<8x128xf32>
    %c0_31 = arith.constant 0 : index
    %c0_32 = arith.constant 0 : index
    %50 = vector.load %arg10[%c0_31, %c0_32] : memref<1x128xf32, #tpu.memory_space<vmem>>, vector<1x128xf32>
    %51 = vector.broadcast %50 : vector<1x128xf32> to vector<8x128xf32>
    %52 = arith.addf %49, %51 : vector<8x128xf32>
    %53 = arith.mulf %52, %52 : vector<8x128xf32>
    %54 = arith.mulf %52, %53 : vector<8x128xf32>
    %cst_33 = arith.constant 4.471500e-02 : f32
    %55 = vector.broadcast %cst_33 : f32 to vector<8x128xf32>
    %56 = arith.mulf %55, %54 : vector<8x128xf32>
    %57 = arith.addf %52, %56 : vector<8x128xf32>
    %cst_34 = arith.constant 0.797884583 : f32
    %58 = vector.broadcast %cst_34 : f32 to vector<8x128xf32>
    %59 = arith.mulf %58, %57 : vector<8x128xf32>
    %60 = math.tanh %59 : vector<8x128xf32>
    %cst_35 = arith.constant 1.000000e+00 : f32
    %61 = vector.broadcast %cst_35 : f32 to vector<8x128xf32>
    %62 = arith.addf %61, %60 : vector<8x128xf32>
    %cst_36 = arith.constant 5.000000e-01 : f32
    %63 = vector.broadcast %cst_36 : f32 to vector<8x128xf32>
    %64 = arith.mulf %63, %62 : vector<8x128xf32>
    %65 = arith.mulf %52, %64 : vector<8x128xf32>
    %c0_37 = arith.constant 0 : index
    %c0_38 = arith.constant 0 : index
    %66 = vector.load %arg11[%c0_37, %c0_38] : memref<1x128xf32, #tpu.memory_space<vmem>>, vector<1x128xf32>
    %67 = vector.broadcast %66 : vector<1x128xf32> to vector<8x128xf32>
    %68 = arith.mulf %65, %67 : vector<8x128xf32>
    %cst_39 = arith.constant dense<0.000000e+00> : vector<8xf32>
    %69 = vector.multi_reduction <add>, %68, %cst_39 [1] : vector<8x128xf32> to vector<8xf32>
    %70 = vector.shape_cast %69 : vector<8xf32> to vector<8x1xf32>
    %c0_40 = arith.constant 0 : index
    %c0_41 = arith.constant 0 : index
    %c0_42 = arith.constant 0 : index
    %71 = vector.load %arg3[%c0_40, %c0_41, %c0_42] : memref<8x8x128xf32, #tpu.memory_space<vmem>>, vector<8x8x128xf32>
    %cst_43 = arith.constant dense<0.000000e+00> : vector<8x128xf32>
    %72 = vector.multi_reduction <add>, %71, %cst_43 [1] : vector<8x8x128xf32> to vector<8x128xf32>
    %cst_44 = arith.constant 8.000000e+00 : f32
    %73 = vector.broadcast %cst_44 : f32 to vector<8x128xf32>
    %74 = arith.divf %72, %73 : vector<8x128xf32>
    %c0_45 = arith.constant 0 : index
    %c0_46 = arith.constant 0 : index
    %75 = vector.load %arg12[%c0_45, %c0_46] : memref<128x128xf32, #tpu.memory_space<vmem>>, vector<128x128xf32>
    %cst_47 = arith.constant dense<0.000000e+00> : vector<8x128xf32>
    %76 = tpu.matmul %74, %75, %cst_47 {dimension_numbers = #tpu.dot_dimension_numbers<[1], [0], [0], [1], [0, 0, 1, 1], [], []>} : vector<8x128xf32>, vector<128x128xf32>, vector<8x128xf32> -> vector<8x128xf32>
    %c0_48 = arith.constant 0 : index
    %c0_49 = arith.constant 0 : index
    %77 = vector.load %arg13[%c0_48, %c0_49] : memref<1x128xf32, #tpu.memory_space<vmem>>, vector<1x128xf32>
    %78 = vector.broadcast %77 : vector<1x128xf32> to vector<8x128xf32>
    %79 = arith.addf %76, %78 : vector<8x128xf32>
    %80 = arith.mulf %12, %79 : vector<8x128xf32>
    %c0_50 = arith.constant 0 : index
    %c0_51 = arith.constant 0 : index
    %81 = vector.load %arg14[%c0_50, %c0_51] : memref<128x128xf32, #tpu.memory_space<vmem>>, vector<128x128xf32>
    %cst_52 = arith.constant dense<0.000000e+00> : vector<8x128xf32>
    %82 = tpu.matmul %80, %81, %cst_52 {dimension_numbers = #tpu.dot_dimension_numbers<[1], [0], [0], [1], [0, 0, 1, 1], [], []>} : vector<8x128xf32>, vector<128x128xf32>, vector<8x128xf32> -> vector<8x128xf32>
    %c0_53 = arith.constant 0 : index
    %c0_54 = arith.constant 0 : index
    %83 = vector.load %arg15[%c0_53, %c0_54] : memref<1x128xf32, #tpu.memory_space<vmem>>, vector<1x128xf32>
    %84 = vector.broadcast %83 : vector<1x128xf32> to vector<8x128xf32>
    %85 = arith.addf %82, %84 : vector<8x128xf32>
    %86 = arith.mulf %85, %85 : vector<8x128xf32>
    %87 = arith.mulf %85, %86 : vector<8x128xf32>
    %cst_55 = arith.constant 4.471500e-02 : f32
    %88 = vector.broadcast %cst_55 : f32 to vector<8x128xf32>
    %89 = arith.mulf %88, %87 : vector<8x128xf32>
    %90 = arith.addf %85, %89 : vector<8x128xf32>
    %cst_56 = arith.constant 0.797884583 : f32
    %91 = vector.broadcast %cst_56 : f32 to vector<8x128xf32>
    %92 = arith.mulf %91, %90 : vector<8x128xf32>
    %93 = math.tanh %92 : vector<8x128xf32>
    %cst_57 = arith.constant 1.000000e+00 : f32
    %94 = vector.broadcast %cst_57 : f32 to vector<8x128xf32>
    %95 = arith.addf %94, %93 : vector<8x128xf32>
    %cst_58 = arith.constant 5.000000e-01 : f32
    %96 = vector.broadcast %cst_58 : f32 to vector<8x128xf32>
    %97 = arith.mulf %96, %95 : vector<8x128xf32>
    %98 = arith.mulf %85, %97 : vector<8x128xf32>
    %c0_59 = arith.constant 0 : index
    %c0_60 = arith.constant 0 : index
    %99 = vector.load %arg16[%c0_59, %c0_60] : memref<1x128xf32, #tpu.memory_space<vmem>>, vector<1x128xf32>
    %100 = vector.broadcast %99 : vector<1x128xf32> to vector<8x128xf32>
    %101 = arith.mulf %98, %100 : vector<8x128xf32>
    %cst_61 = arith.constant dense<0.000000e+00> : vector<8xf32>
    %102 = vector.multi_reduction <add>, %101, %cst_61 [1] : vector<8x128xf32> to vector<8xf32>
    %103 = vector.shape_cast %102 : vector<8xf32> to vector<8x1xf32>
    %104 = tpu.iota {dimensions = array<i32: 1>} : vector<8x128xi32>
    %c0_i32 = arith.constant 0 : i32
    %105 = vector.broadcast %c0_i32 : i32 to vector<8x128xi32>
    %106 = arith.cmpi eq, %104, %105 : vector<8x128xi32>
    %cst_62 = arith.constant 0.000000e+00 : f32
    %107 = vector.shape_cast %35 : vector<8x1xf32> to vector<8x1xf32>
    %108 = vector.broadcast %107 : vector<8x1xf32> to vector<8x128xf32>
    %109 = vector.broadcast %cst_62 : f32 to vector<8x128xf32>
    %110 = arith.select %106, %108, %109 : vector<8x128xi1>, vector<8x128xf32>
    %c1_i32 = arith.constant 1 : i32
    %111 = vector.broadcast %c1_i32 : i32 to vector<8x128xi32>
    %112 = arith.cmpi eq, %104, %111 : vector<8x128xi32>
    %cst_63 = arith.constant 0.000000e+00 : f32
    %113 = vector.shape_cast %70 : vector<8x1xf32> to vector<8x1xf32>
    %114 = vector.broadcast %113 : vector<8x1xf32> to vector<8x128xf32>
    %115 = vector.broadcast %cst_63 : f32 to vector<8x128xf32>
    %116 = arith.select %112, %114, %115 : vector<8x128xi1>, vector<8x128xf32>
    %117 = arith.addf %110, %116 : vector<8x128xf32>
    %c2_i32 = arith.constant 2 : i32
    %118 = vector.broadcast %c2_i32 : i32 to vector<8x128xi32>
    %119 = arith.cmpi eq, %104, %118 : vector<8x128xi32>
    %cst_64 = arith.constant 0.000000e+00 : f32
    %120 = vector.shape_cast %103 : vector<8x1xf32> to vector<8x1xf32>
    %121 = vector.broadcast %120 : vector<8x1xf32> to vector<8x128xf32>
    %122 = vector.broadcast %cst_64 : f32 to vector<8x128xf32>
    %123 = arith.select %119, %121, %122 : vector<8x128xi1>, vector<8x128xf32>
    %124 = arith.addf %117, %123 : vector<8x128xf32>
    %c3_i32 = arith.constant 3 : i32
    %125 = vector.broadcast %c3_i32 : i32 to vector<8x128xi32>
    %126 = arith.cmpi eq, %104, %125 : vector<8x128xi32>
    %127 = arith.addf %35, %70 : vector<8x1xf32>
    %128 = arith.addf %127, %103 : vector<8x1xf32>
    %cst_65 = arith.constant 0.000000e+00 : f32
    %129 = vector.shape_cast %128 : vector<8x1xf32> to vector<8x1xf32>
    %130 = vector.broadcast %129 : vector<8x1xf32> to vector<8x128xf32>
    %131 = vector.broadcast %cst_65 : f32 to vector<8x128xf32>
    %132 = arith.select %126, %130, %131 : vector<8x128xi1>, vector<8x128xf32>
    %133 = arith.addf %124, %132 : vector<8x128xf32>
    %c0_66 = arith.constant 0 : index
    %c0_67 = arith.constant 0 : index
    %134 = vector.load %arg17[%c0_66, %c0_67] : memref<1x128xf32, #tpu.memory_space<vmem>>, vector<1x128xf32>
    %135 = vector.broadcast %134 : vector<1x128xf32> to vector<8x128xf32>
    %136 = arith.addf %133, %135 : vector<8x128xf32>
    %c0_68 = arith.constant 0 : index
    %c0_69 = arith.constant 0 : index
    %137 = vector.load %arg18[%c0_68, %c0_69] : memref<8x128xf32, #tpu.memory_space<vmem>>, vector<8x128xf32>
    tpu.vector_store %arg18[%c0_68, %c0_69], %136 {strides = array<i32>} : memref<8x128xf32, #tpu.memory_space<vmem>>, vector<8x128xf32>,
    return
  }
}

</mosaic_0001>

<llo_original>
// kernel: _lambda_.1
$region0: #{_lambda_.1}
  #allocation0 [shape = 'u32[]', space=smem, size = 0x4, offset = 0x4, fixed_abs, tag = 'smem constant byte address 0x4 - core index']
  #allocation1 [shape = 'u32[72,128]{1,0:T(1,128)}', space=vmem, size = 0x9000, scoped, tag = 'internal scratch']
  %s0 = inlined_call_operand.vmem [shape: bf16[64,256], index: 0, kind: input, shape index: {}]
  %s1 = inlined_call_operand.vmem [shape: f32[8,64], index: 1, kind: input, shape index: {}]
  %s2 = inlined_call_operand.vmem [shape: f32[8,64], index: 2, kind: input, shape index: {}]
  %s3 = inlined_call_operand.vmem [shape: f32[8,8,128], index: 3, kind: input, shape index: {}]
  %s4 = inlined_call_operand.vmem [shape: bf16[256,128], index: 4, kind: input, shape index: {}]
  %s5 = inlined_call_operand.vmem [shape: f32[1,128], index: 5, kind: input, shape index: {}, may-alias: {5,7,10,13,15,17}]
  %s6 = inlined_call_operand.vmem [shape: f32[128,128], index: 6, kind: input, shape index: {}]
  %s7 = inlined_call_operand.vmem [shape: f32[1,128], index: 7, kind: input, shape index: {}, may-alias: {5,7,10,13,15,17}]
  %s8 = inlined_call_operand.vmem [shape: f32[1,128], index: 8, kind: input, shape index: {}]
  %s9 = inlined_call_operand.vmem [shape: f32[512,128], index: 9, kind: input, shape index: {}]
  %s10 = inlined_call_operand.vmem [shape: f32[1,128], index: 10, kind: input, shape index: {}, may-alias: {5,7,10,13,15,17}]
  %s11 = inlined_call_operand.vmem [shape: f32[1,128], index: 11, kind: input, shape index: {}]
  %s12 = inlined_call_operand.vmem [shape: f32[128,128], index: 12, kind: input, shape index: {}]
  %s13 = inlined_call_operand.vmem [shape: f32[1,128], index: 13, kind: input, shape index: {}, may-alias: {5,7,10,13,15,17}]
  %s14 = inlined_call_operand.vmem [shape: f32[128,128], index: 14, kind: input, shape index: {}]
  %s15 = inlined_call_operand.vmem [shape: f32[1,128], index: 15, kind: input, shape index: {}, may-alias: {5,7,10,13,15,17}]
  %s16 = inlined_call_operand.vmem [shape: f32[1,128], index: 16, kind: input, shape index: {}]
  %s17 = inlined_call_operand.vmem [shape: f32[1,128], index: 17, kind: input, shape index: {}, may-alias: {5,7,10,13,15,17}]
  %s18 = inlined_call_operand.vmem [shape: f32[8,128], index: 18, kind: output, shape index: {}]
  %s19 = sld [smem:[#allocation0]]
  $region82: #{_lambda_.1} parent=0
    _
  %s21 = ssub.s32 1, %s19
  %s22 = scalar_select 0, %s21, %s19
  // Predicated region
  $region2: #{_lambda_.1} parent=0 // pred_check
    _
  $region3: #{_lambda_.1} parent=0 // pred_check_branch
    %24 = sbr.rel (0) target = $region5
  $region4: #{_lambda_.1} parent=0 // pred_region
    _
  $region5: #{_lambda_.1} parent=0 // pred_fallthru
    _
  // Predicated region
  $region6: #{_lambda_.1} parent=0 // pred_check
    _
  $region7: #{_lambda_.1} parent=0 // pred_check_branch
    %26 = sbr.rel (0) target = $region9
  $region8: #{_lambda_.1} parent=0 // pred_region
    _
  $region9: #{_lambda_.1} parent=0 // pred_fallthru
    _
  // Predicated region
  $region10: #{_lambda_.1} parent=0 // pred_check
    _
  $region11: #{_lambda_.1} parent=0 // pred_check_branch
    %28 = sbr.rel (0) target = $region13
  $region12: #{_lambda_.1} parent=0 // pred_region
    _
  $region13: #{_lambda_.1} parent=0 // pred_fallthru
    _
  // Predicated region
  $region14: #{_lambda_.1} parent=0 // pred_check
    _
  $region15: #{_lambda_.1} parent=0 // pred_check_branch
    %30 = sbr.rel (0) target = $region17
  $region16: #{_lambda_.1} parent=0 // pred_region
    _
  $region17: #{_lambda_.1} parent=0 // pred_fallthru
    _
  // Predicated region
  $region18: #{_lambda_.1} parent=0 // pred_check
    _
  $region19: #{_lambda_.1} parent=0 // pred_check_branch
    %32 = sbr.rel (0) target = $region21
  $region20: #{_lambda_.1} parent=0 // pred_region
    _
  $region21: #{_lambda_.1} parent=0 // pred_fallthru
    _
  // Predicated region
  $region22: #{_lambda_.1} parent=0 // pred_check
    _
  $region23: #{_lambda_.1} parent=0 // pred_check_branch
    %34 = sbr.rel (0) target = $region25
  $region24: #{_lambda_.1} parent=0 // pred_region
    _
  $region25: #{_lambda_.1} parent=0 // pred_fallthru
    _
  // Predicated region
  $region26: #{_lambda_.1} parent=0 // pred_check
    _
  $region27: #{_lambda_.1} parent=0 // pred_check_branch
    %36 = sbr.rel (0) target = $region29
  $region28: #{_lambda_.1} parent=0 // pred_region
    _
  $region29: #{_lambda_.1} parent=0 // pred_fallthru
    _
  // Predicated region
  $region30: #{_lambda_.1} parent=0 // pred_check
    _
  $region31: #{_lambda_.1} parent=0 // pred_check_branch
    %38 = sbr.rel (0) target = $region33
  $region32: #{_lambda_.1} parent=0 // pred_region
    _
  $region33: #{_lambda_.1} parent=0 // pred_fallthru
    _
  // Predicated region
  $region34: #{_lambda_.1} parent=0 // pred_check
    _
  $region35: #{_lambda_.1} parent=0 // pred_check_branch
    %40 = sbr.rel (0) target = $region37
  $region36: #{_lambda_.1} parent=0 // pred_region
    _
  $region37: #{_lambda_.1} parent=0 // pred_fallthru
    _
  // Predicated region
  $region38: #{_lambda_.1} parent=0 // pred_check
    _
  $region39: #{_lambda_.1} parent=0 // pred_check_branch
    %42 = sbr.rel (0) target = $region41
  $region40: #{_lambda_.1} parent=0 // pred_region
    _
  $region41: #{_lambda_.1} parent=0 // pred_fallthru
    _
  // Predicated region
  $region42: #{_lambda_.1} parent=0 // pred_check
    _
  $region43: #{_lambda_.1} parent=0 // pred_check_branch
    %44 = sbr.rel (0) target = $region45
  $region44: #{_lambda_.1} parent=0 // pred_region
    _
  $region45: #{_lambda_.1} parent=0 // pred_fallthru
    _
  // Predicated region
  $region46: #{_lambda_.1} parent=0 // pred_check
    _
  $region47: #{_lambda_.1} parent=0 // pred_check_branch
    %46 = sbr.rel (0) target = $region49
  $region48: #{_lambda_.1} parent=0 // pred_region
    _
  $region49: #{_lambda_.1} parent=0 // pred_fallthru
    _
  // Predicated region
  $region50: #{_lambda_.1} parent=0 // pred_check
    _
  $region51: #{_lambda_.1} parent=0 // pred_check_branch
    %48 = sbr.rel (0) target = $region53
  $region52: #{_lambda_.1} parent=0 // pred_region
    _
  $region53: #{_lambda_.1} parent=0 // pred_fallthru
    _
  // Predicated region
  $region54: #{_lambda_.1} parent=0 // pred_check
    _
  $region55: #{_lambda_.1} parent=0 // pred_check_branch
    %50 = sbr.rel (0) target = $region57
  $region56: #{_lambda_.1} parent=0 // pred_region
    _
  $region57: #{_lambda_.1} parent=0 // pred_fallthru
    _
  // Predicated region
  $region58: #{_lambda_.1} parent=0 // pred_check
    _
  $region59: #{_lambda_.1} parent=0 // pred_check_branch
    %52 = sbr.rel (0) target = $region61
  $region60: #{_lambda_.1} parent=0 // pred_region
    _
  $region61: #{_lambda_.1} parent=0 // pred_fallthru
    _
  // Predicated region
  $region62: #{_lambda_.1} parent=0 // pred_check
    _
  $region63: #{_lambda_.1} parent=0 // pred_check_branch
    %54 = sbr.rel (0) target = $region65
  $region64: #{_lambda_.1} parent=0 // pred_region
    _
  $region65: #{_lambda_.1} parent=0 // pred_fallthru
    _
  // Predicated region
  $region66: #{_lambda_.1} parent=0 // pred_check
    _
  $region67: #{_lambda_.1} parent=0 // pred_check_branch
    %56 = sbr.rel (0) target = $region69
  $region68: #{_lambda_.1} parent=0 // pred_region
    _
  $region69: #{_lambda_.1} parent=0 // pred_fallthru
    _
  // Predicated region
  $region70: #{_lambda_.1} parent=0 // pred_check
    _
  $region71: #{_lambda_.1} parent=0 // pred_check_branch
    %58 = sbr.rel (0) target = $region73
  $region72: #{_lambda_.1} parent=0 // pred_region
    _
  $region73: #{_lambda_.1} parent=0 // pred_fallthru
    _
  %v59 = vld [vmem:[%s0] sm:$0xff]
  %v60 = vld [vmem:[%s0 + $0x8] sm:$0xff]
  %v61 = vld [vmem:[%s0 + $0x10] sm:$0xff]
  %v62 = vld [vmem:[%s0 + $0x18] sm:$0xff]
  %v63 = vld [vmem:[%s0 + $0x20] sm:$0xff]
  %v64 = vld [vmem:[%s0 + $0x28] sm:$0xff]
  %v65 = vld [vmem:[%s0 + $0x30] sm:$0xff]
  %v66 = vld [vmem:[%s0 + $0x38] sm:$0xff]
  %v67 = vld [vmem:[%s4] sm:$0xf]
  %v68 = vld [vmem:[%s4 + $0x4] sm:$0xf]
  %v69 = vld [vmem:[%s4 + $0x8] sm:$0xf]
  %v70 = vld [vmem:[%s4 + $0xc] sm:$0xf]
  %v71 = vld [vmem:[%s4 + $0x10] sm:$0xf]
  %v72 = vld [vmem:[%s4 + $0x14] sm:$0xf]
  %v73 = vld [vmem:[%s4 + $0x18] sm:$0xf]
  %v74 = vld [vmem:[%s4 + $0x1c] sm:$0xf]
  %v75 = vld [vmem:[%s4 + $0x20] sm:$0xf]
  %v76 = vld [vmem:[%s4 + $0x24] sm:$0xf]
  %v77 = vld [vmem:[%s4 + $0x28] sm:$0xf]
  %v78 = vld [vmem:[%s4 + $0x2c] sm:$0xf]
  %v79 = vld [vmem:[%s4 + $0x30] sm:$0xf]
  %v80 = vld [vmem:[%s4 + $0x34] sm:$0xf]
  %v81 = vld [vmem:[%s4 + $0x38] sm:$0xf]
  %v82 = vld [vmem:[%s4 + $0x3c] sm:$0xf]
  %v83 = vld [vmem:[%s4 + $0x40] sm:$0xf]
  %v84 = vld [vmem:[%s4 + $0x44] sm:$0xf]
  %v85 = vld [vmem:[%s4 + $0x48] sm:$0xf]
  %v86 = vld [vmem:[%s4 + $0x4c] sm:$0xf]
  %v87 = vld [vmem:[%s4 + $0x50] sm:$0xf]
  %v88 = vld [vmem:[%s4 + $0x54] sm:$0xf]
  %v89 = vld [vmem:[%s4 + $0x58] sm:$0xf]
  %v90 = vld [vmem:[%s4 + $0x5c] sm:$0xf]
  %v91 = vld [vmem:[%s4 + $0x60] sm:$0xf]
  %v92 = vld [vmem:[%s4 + $0x64] sm:$0xf]
  %v93 = vld [vmem:[%s4 + $0x68] sm:$0xf]
  %v94 = vld [vmem:[%s4 + $0x6c] sm:$0xf]
  %v95 = vld [vmem:[%s4 + $0x70] sm:$0xf]
  %v96 = vld [vmem:[%s4 + $0x74] sm:$0xf]
  %v97 = vld [vmem:[%s4 + $0x78] sm:$0xf]
  %v98 = vld [vmem:[%s4 + $0x7c] sm:$0xf]
  %v107 = vunpack.c.l.b16 %v59
  %v108 = vunpack.c.h.b16 %v59
  %v109 = vunpack.c.l.b16 %v60
  %v110 = vunpack.c.h.b16 %v60
  %v111 = vunpack.c.l.b16 %v61
  %v112 = vunpack.c.h.b16 %v61
  %v113 = vunpack.c.l.b16 %v62
  %v114 = vunpack.c.h.b16 %v62
  %v115 = vunpack.c.l.b16 %v63
  %v116 = vunpack.c.h.b16 %v63
  %v117 = vunpack.c.l.b16 %v64
  %v118 = vunpack.c.h.b16 %v64
  %v119 = vunpack.c.l.b16 %v65
  %v120 = vunpack.c.h.b16 %v65
  %v121 = vunpack.c.l.b16 %v66
  %v122 = vunpack.c.h.b16 %v66
  %v123 = vpack.c.b16 %v109, %v107
  %v124 = vpack.c.b16 %v110, %v108
  %v125 = vpack.c.b16 %v113, %v111
  %v126 = vpack.c.b16 %v114, %v112
  %v127 = vpack.c.b16 %v117, %v115
  %v128 = vpack.c.b16 %v118, %v116
  %v129 = vpack.c.b16 %v121, %v119
  %v130 = vpack.c.b16 %v122, %v120
  %v171 = vunpack.c.l.b16 %v67
  %v172 = vunpack.c.l.b16 %v68
  %v173 = vunpack.c.l.b16 %v69
  %v174 = vunpack.c.l.b16 %v70
  %v175 = vunpack.c.l.b16 %v71
  %v176 = vunpack.c.l.b16 %v72
  %v177 = vunpack.c.l.b16 %v73
  %v178 = vunpack.c.l.b16 %v74
  %v179 = vunpack.c.l.b16 %v75
  %v180 = vunpack.c.l.b16 %v76
  %v181 = vunpack.c.l.b16 %v77
  %v182 = vunpack.c.l.b16 %v78
  %v183 = vunpack.c.l.b16 %v79
  %v184 = vunpack.c.l.b16 %v80
  %v185 = vunpack.c.l.b16 %v81
  %v186 = vunpack.c.l.b16 %v82
  %v187 = vunpack.c.l.b16 %v83
  %v188 = vunpack.c.l.b16 %v84
  %v189 = vunpack.c.l.b16 %v85
  %v190 = vunpack.c.l.b16 %v86
  %v191 = vunpack.c.l.b16 %v87
  %v192 = vunpack.c.l.b16 %v88
  %v193 = vunpack.c.l.b16 %v89
  %v194 = vunpack.c.l.b16 %v90
  %v195 = vunpack.c.l.b16 %v91
  %v196 = vunpack.c.l.b16 %v92
  %v197 = vunpack.c.l.b16 %v93
  %v198 = vunpack.c.l.b16 %v94
  %v199 = vunpack.c.l.b16 %v95
  %v200 = vunpack.c.l.b16 %v96
  %v201 = vunpack.c.l.b16 %v97
  %v202 = vunpack.c.l.b16 %v98
  %v203 = vpack.c.b16 %v172, %v171
  %v204 = vpack.c.b16 %v174, %v173
  %v205 = vpack.c.b16 %v176, %v175
  %v206 = vpack.c.b16 %v178, %v177
  %v207 = vpack.c.b16 %v180, %v179
  %v208 = vpack.c.b16 %v182, %v181
  %v209 = vpack.c.b16 %v184, %v183
  %v210 = vpack.c.b16 %v186, %v185
  %v211 = vpack.c.b16 %v188, %v187
  %v212 = vpack.c.b16 %v190, %v189
  %v213 = vpack.c.b16 %v192, %v191
  %v214 = vpack.c.b16 %v194, %v193
  %v215 = vpack.c.b16 %v196, %v195
  %v216 = vpack.c.b16 %v198, %v197
  %v217 = vpack.c.b16 %v200, %v199
  %v218 = vpack.c.b16 %v202, %v201
  %235 = vmatpush.bf16.msra.mxu0 %v210
  %236 = vmatpush.bf16.msra.mxu0 %v209
  %237 = vmatpush.bf16.msra.mxu0 %v208
  %238 = vmatpush.bf16.msra.mxu0 %v207
  %239 = vmatpush.bf16.msra.mxu0 %v206
  %240 = vmatpush.bf16.msra.mxu0 %v205
  %241 = vmatpush.bf16.msra.mxu0 %v204
  %242 = vmatpush.bf16.msra.mxu0 %v203
  %243 = vmatmul.bf16.gmra.mxu0 %v123
  %v244 = vpop.f32.mrf.mxu0
  %v245 = vadd.f32 0.0, %v244
  %v246 = vpop.f32.mrf.mxu0
  %v247 = vadd.f32 0.0, %v246
  %248 = vmatmul.bf16.gmra.mxu0 %v125
  %v249 = vpop.f32.mrf.mxu0
  %v250 = vadd.f32 0.0, %v249
  %v251 = vpop.f32.mrf.mxu0
  %v252 = vadd.f32 0.0, %v251
  %253 = vmatmul.bf16.gmra.mxu0 %v127
  %v254 = vpop.f32.mrf.mxu0
  %v255 = vadd.f32 0.0, %v254
  %v256 = vpop.f32.mrf.mxu0
  %v257 = vadd.f32 0.0, %v256
  %258 = vmatmul.bf16.gmra.mxu0 %v129
  %v259 = vpop.f32.mrf.mxu0
  %v260 = vadd.f32 0.0, %v259
  %v261 = vpop.f32.mrf.mxu0
  %v262 = vadd.f32 0.0, %v261
  %263 = vdwg.mxu0
  %264 = vmatpush.bf16.msra.mxu0 %v218
  %265 = vmatpush.bf16.msra.mxu0 %v217
  %266 = vmatpush.bf16.msra.mxu0 %v216
  %267 = vmatpush.bf16.msra.mxu0 %v215
  %268 = vmatpush.bf16.msra.mxu0 %v214
  %269 = vmatpush.bf16.msra.mxu0 %v213
  %270 = vmatpush.bf16.msra.mxu0 %v212
  %271 = vmatpush.bf16.msra.mxu0 %v211
  %272 = vmatmul.bf16.gmra.mxu0 %v124
  %v273 = vpop.f32.mrf.mxu0
  %v274 = vadd.f32 %v245, %v273
  %v275 = vpop.f32.mrf.mxu0
  %v276 = vadd.f32 %v247, %v275
  %277 = vmatmul.bf16.gmra.mxu0 %v126
  %v278 = vpop.f32.mrf.mxu0
  %v279 = vadd.f32 %v250, %v278
  %v280 = vpop.f32.mrf.mxu0
  %v281 = vadd.f32 %v252, %v280
  %282 = vmatmul.bf16.gmra.mxu0 %v128
  %v283 = vpop.f32.mrf.mxu0
  %v284 = vadd.f32 %v255, %v283
  %v285 = vpop.f32.mrf.mxu0
  %v286 = vadd.f32 %v257, %v285
  %287 = vmatmul.bf16.gmra.mxu0 %v130
  %v288 = vpop.f32.mrf.mxu0
  %v289 = vadd.f32 %v260, %v288
  %v290 = vpop.f32.mrf.mxu0
  %v291 = vadd.f32 %v262, %v290
  %292 = vdwg.mxu0
  %v293 = vld [vmem:[%s1] sm:$0xff]
  %v294 = vld [vmem:[%s5] sm:$0x1]
  %v296 = vperm.slane %v294, 0
  %vm298 = vcmask 523264
  %v300 = vsel %vm298, %v293, 0
  %302 = vmatpush.msra.mxu0 0.0
  %303 = vmatpush.msra.mxu0 0.0
  %304 = vmatpush.msra.mxu0 0.0
  %305 = vmatpush.msra.mxu0 0.0
  %306 = vmatpush.msra.mxu0 0.0
  %307 = vmatpush.msra.mxu0 0.0
  %308 = vmatpush.msra.mxu0 0.0
  %309 = vmatpush.msra.mxu0 0.0
  %310 = vmatpush.msra.mxu0 %v291
  %311 = vmatpush.msra.mxu0 %v289
  %312 = vmatpush.msra.mxu0 %v286
  %313 = vmatpush.msra.mxu0 %v284
  %314 = vmatpush.msra.mxu0 %v281
  %315 = vmatpush.msra.mxu0 %v279
  %316 = vmatpush.msra.mxu0 %v276
  %317 = vmatpush.msra.mxu0 %v274
  %318 = vmatmul.f32.gmra.mxu0 %v300
  %v319 = vpop.f32.mrf.mxu0
  %v320 = vadd.f32 %v296, %v319
  %321 = vdwg.mxu0
  %v322 = vld [vmem:[%s2] sm:$0xff]
  %v324 = vsel %vm298, %v322, 0
  %326 = vmatpush.msra.mxu0 0.0
  %327 = vmatpush.msra.mxu0 0.0
  %328 = vmatpush.msra.mxu0 0.0
  %329 = vmatpush.msra.mxu0 0.0
  %330 = vmatpush.msra.mxu0 0.0
  %331 = vmatpush.msra.mxu0 0.0
  %332 = vmatpush.msra.mxu0 0.0
  %333 = vmatpush.msra.mxu0 0.0
  %334 = vmatpush.msra.mxu0 %v291
  %335 = vmatpush.msra.mxu0 %v289
  %336 = vmatpush.msra.mxu0 %v286
  %337 = vmatpush.msra.mxu0 %v284
  %338 = vmatpush.msra.mxu0 %v281
  %339 = vmatpush.msra.mxu0 %v279
  %340 = vmatpush.msra.mxu0 %v276
  %341 = vmatpush.msra.mxu0 %v274
  %342 = vmatmul.f32.gmra.mxu0 %v324
  %v343 = vpop.f32.mrf.mxu0
  %v344 = vadd.f32 %v296, %v343
  %345 = vdwg.mxu0
  %v346 = vld [vmem:[%s6] sm:$0xff]
  %v347 = vld [vmem:[%s6 + $0x8] sm:$0xff]
  %v348 = vld [vmem:[%s6 + $0x10] sm:$0xff]
  %v349 = vld [vmem:[%s6 + $0x18] sm:$0xff]
  %v350 = vld [vmem:[%s6 + $0x20] sm:$0xff]
  %v351 = vld [vmem:[%s6 + $0x28] sm:$0xff]
  %v352 = vld [vmem:[%s6 + $0x30] sm:$0xff]
  %v353 = vld [vmem:[%s6 + $0x38] sm:$0xff]
  %v354 = vld [vmem:[%s6 + $0x40] sm:$0xff]
  %v355 = vld [vmem:[%s6 + $0x48] sm:$0xff]
  %v356 = vld [vmem:[%s6 + $0x50] sm:$0xff]
  %v357 = vld [vmem:[%s6 + $0x58] sm:$0xff]
  %v358 = vld [vmem:[%s6 + $0x60] sm:$0xff]
  %v359 = vld [vmem:[%s6 + $0x68] sm:$0xff]
  %v360 = vld [vmem:[%s6 + $0x70] sm:$0xff]
  %v361 = vld [vmem:[%s6 + $0x78] sm:$0xff]
  %v362 = vld [vmem:[%s7] sm:$0x1]
  %v364 = vperm.slane %v362, 0
  %366 = vmatpush.msra.mxu0 %v361
  %367 = vmatpush.msra.mxu0 %v360
  %368 = vmatpush.msra.mxu0 %v359
  %369 = vmatpush.msra.mxu0 %v358
  %370 = vmatpush.msra.mxu0 %v357
  %371 = vmatpush.msra.mxu0 %v356
  %372 = vmatpush.msra.mxu0 %v355
  %373 = vmatpush.msra.mxu0 %v354
  %374 = vmatpush.msra.mxu0 %v353
  %375 = vmatpush.msra.mxu0 %v352
  %376 = vmatpush.msra.mxu0 %v351
  %377 = vmatpush.msra.mxu0 %v350
  %378 = vmatpush.msra.mxu0 %v349
  %379 = vmatpush.msra.mxu0 %v348
  %380 = vmatpush.msra.mxu0 %v347
  %381 = vmatpush.msra.mxu0 %v346
  %382 = vmatmul.f32.gmra.mxu0 %v344
  %v383 = vpop.f32.mrf.mxu0
  %v384 = vadd.f32 %v364, %v383
  %385 = vdwg.mxu0
  %v386 = vmul.f32 %v384, %v384
  %v387 = vmul.f32 %v384, %v386
  %v388 = vmul.f32 %v387, 0.044715
  %v389 = vadd.f32 %v384, %v388
  %v390 = vmul.f32 %v389, 0.7978846
  %v391 = vtanh.pop %v390
  %v392 = vadd.f32 %v391, 1.0
  %v393 = vmul.f32 %v392, 0.5
  %v394 = vmul.f32 %v384, %v393
  %v395 = vld [vmem:[%s8] sm:$0x1]
  %v397 = vperm.slane %v395, 0
  %v399 = vmul.f32 %v394, %v397
  %400 = vadd.xlane.f32.xlu0 %v399
  %v401 = vpop.xlane.xlu0 %400
  %v402 = vld [vmem:[%s9] sm:$0xff]
  %v403 = vld [vmem:[%s9 + $0x8] sm:$0xff]
  %v404 = vld [vmem:[%s9 + $0x10] sm:$0xff]
  %v405 = vld [vmem:[%s9 + $0x18] sm:$0xff]
  %v406 = vld [vmem:[%s9 + $0x20] sm:$0xff]
  %v407 = vld [vmem:[%s9 + $0x28] sm:$0xff]
  %v408 = vld [vmem:[%s9 + $0x30] sm:$0xff]
  %v409 = vld [vmem:[%s9 + $0x38] sm:$0xff]
  %v410 = vld [vmem:[%s9 + $0x40] sm:$0xff]
  %v411 = vld [vmem:[%s9 + $0x48] sm:$0xff]
  %v412 = vld [vmem:[%s9 + $0x50] sm:$0xff]
  %v413 = vld [vmem:[%s9 + $0x58] sm:$0xff]
  %v414 = vld [vmem:[%s9 + $0x60] sm:$0xff]
  %v415 = vld [vmem:[%s9 + $0x68] sm:$0xff]
  %v416 = vld [vmem:[%s9 + $0x70] sm:$0xff]
  %v417 = vld [vmem:[%s9 + $0x78] sm:$0xff]
  %v418 = vld [vmem:[%s9 + $0x80] sm:$0xff]
  %v419 = vld [vmem:[%s9 + $0x88] sm:$0xff]
  %v420 = vld [vmem:[%s9 + $0x90] sm:$0xff]
  %v421 = vld [vmem:[%s9 + $0x98] sm:$0xff]
  %v422 = vld [vmem:[%s9 + $0xa0] sm:$0xff]
  %v423 = vld [vmem:[%s9 + $0xa8] sm:$0xff]
  %v424 = vld [vmem:[%s9 + $0xb0] sm:$0xff]
  %v425 = vld [vmem:[%s9 + $0xb8] sm:$0xff]
  %v426 = vld [vmem:[%s9 + $0xc0] sm:$0xff]
  %v427 = vld [vmem:[%s9 + $0xc8] sm:$0xff]
  %v428 = vld [vmem:[%s9 + $0xd0] sm:$0xff]
  %v429 = vld [vmem:[%s9 + $0xd8] sm:$0xff]
  %v430 = vld [vmem:[%s9 + $0xe0] sm:$0xff]
  %v431 = vld [vmem:[%s9 + $0xe8] sm:$0xff]
  %v432 = vld [vmem:[%s9 + $0xf0] sm:$0xff]
  %v433 = vld [vmem:[%s9 + $0xf8] sm:$0xff]
  %v434 = vld [vmem:[%s9 + $0x100] sm:$0xff]
  %v435 = vld [vmem:[%s9 + $0x108] sm:$0xff]
  %v436 = vld [vmem:[%s9 + $0x110] sm:$0xff]
  %v437 = vld [vmem:[%s9 + $0x118] sm:$0xff]
  %v438 = vld [vmem:[%s9 + $0x120] sm:$0xff]
  %v439 = vld [vmem:[%s9 + $0x128] sm:$0xff]
  %v440 = vld [vmem:[%s9 + $0x130] sm:$0xff]
  %v441 = vld [vmem:[%s9 + $0x138] sm:$0xff]
  %v442 = vld [vmem:[%s9 + $0x140] sm:$0xff]
  %v443 = vld [vmem:[%s9 + $0x148] sm:$0xff]
  %v444 = vld [vmem:[%s9 + $0x150] sm:$0xff]
  %v445 = vld [vmem:[%s9 + $0x158] sm:$0xff]
  %v446 = vld [vmem:[%s9 + $0x160] sm:$0xff]
  %v447 = vld [vmem:[%s9 + $0x168] sm:$0xff]
  %v448 = vld [vmem:[%s9 + $0x170] sm:$0xff]
  %v449 = vld [vmem:[%s9 + $0x178] sm:$0xff]
  %v450 = vld [vmem:[%s9 + $0x180] sm:$0xff]
  %v451 = vld [vmem:[%s9 + $0x188] sm:$0xff]
  %v452 = vld [vmem:[%s9 + $0x190] sm:$0xff]
  %v453 = vld [vmem:[%s9 + $0x198] sm:$0xff]
  %v454 = vld [vmem:[%s9 + $0x1a0] sm:$0xff]
  %v455 = vld [vmem:[%s9 + $0x1a8] sm:$0xff]
  %v456 = vld [vmem:[%s9 + $0x1b0] sm:$0xff]
  %v457 = vld [vmem:[%s9 + $0x1b8] sm:$0xff]
  %v458 = vld [vmem:[%s9 + $0x1c0] sm:$0xff]
  %v459 = vld [vmem:[%s9 + $0x1c8] sm:$0xff]
  %v460 = vld [vmem:[%s9 + $0x1d0] sm:$0xff]
  %v461 = vld [vmem:[%s9 + $0x1d8] sm:$0xff]
  %v462 = vld [vmem:[%s9 + $0x1e0] sm:$0xff]
  %v463 = vld [vmem:[%s9 + $0x1e8] sm:$0xff]
  %v464 = vld [vmem:[%s9 + $0x1f0] sm:$0xff]
  %v465 = vld [vmem:[%s9 + $0x1f8] sm:$0xff]
  %466 = vmatpush.msra.mxu0 %v433
  %467 = vmatpush.msra.mxu0 %v432
  %468 = vmatpush.msra.mxu0 %v431
  %469 = vmatpush.msra.mxu0 %v430
  %470 = vmatpush.msra.mxu0 %v429
  %471 = vmatpush.msra.mxu0 %v428
  %472 = vmatpush.msra.mxu0 %v427
  %473 = vmatpush.msra.mxu0 %v426
  %474 = vmatpush.msra.mxu0 %v425
  %475 = vmatpush.msra.mxu0 %v424
  %476 = vmatpush.msra.mxu0 %v423
  %477 = vmatpush.msra.mxu0 %v422
  %478 = vmatpush.msra.mxu0 %v421
  %479 = vmatpush.msra.mxu0 %v420
  %480 = vmatpush.msra.mxu0 %v419
  %481 = vmatpush.msra.mxu0 %v418
  %482 = vmatmul.f32.gmra.mxu0 %v344
  %v483 = vpop.f32.mrf.mxu0
  %v484 = vadd.f32 0.0, %v483
  %485 = vdwg.mxu0
  %486 = vmatpush.msra.mxu0 %v417
  %487 = vmatpush.msra.mxu0 %v416
  %488 = vmatpush.msra.mxu0 %v415
  %489 = vmatpush.msra.mxu0 %v414
  %490 = vmatpush.msra.mxu0 %v413
  %491 = vmatpush.msra.mxu0 %v412
  %492 = vmatpush.msra.mxu0 %v411
  %493 = vmatpush.msra.mxu0 %v410
  %494 = vmatpush.msra.mxu0 %v409
  %495 = vmatpush.msra.mxu0 %v408
  %496 = vmatpush.msra.mxu0 %v407
  %497 = vmatpush.msra.mxu0 %v406
  %498 = vmatpush.msra.mxu0 %v405
  %499 = vmatpush.msra.mxu0 %v404
  %500 = vmatpush.msra.mxu0 %v403
  %501 = vmatpush.msra.mxu0 %v402
  %502 = vmatmul.f32.gmra.mxu0 %v320
  %v503 = vpop.f32.mrf.mxu0
  %v504 = vadd.f32 %v484, %v503
  %505 = vdwg.mxu0
  %v506 = vsub.f32 %v320, %v344
  %507 = vmatpush.msra.mxu0 %v449
  %508 = vmatpush.msra.mxu0 %v448
  %509 = vmatpush.msra.mxu0 %v447
  %510 = vmatpush.msra.mxu0 %v446
  %511 = vmatpush.msra.mxu0 %v445
  %512 = vmatpush.msra.mxu0 %v444
  %513 = vmatpush.msra.mxu0 %v443
  %514 = vmatpush.msra.mxu0 %v442
  %515 = vmatpush.msra.mxu0 %v441
  %516 = vmatpush.msra.mxu0 %v440
  %517 = vmatpush.msra.mxu0 %v439
  %518 = vmatpush.msra.mxu0 %v438
  %519 = vmatpush.msra.mxu0 %v437
  %520 = vmatpush.msra.mxu0 %v436
  %521 = vmatpush.msra.mxu0 %v435
  %522 = vmatpush.msra.mxu0 %v434
  %523 = vmatmul.f32.gmra.mxu0 %v506
  %v524 = vpop.f32.mrf.mxu0
  %v525 = vadd.f32 0.0, %v524
  %526 = vdwg.mxu0
  %v527 = vadd.f32 %v504, %v525
  %v528 = vmul.f32 %v320, %v344
  %529 = vmatpush.msra.mxu0 %v465
  %530 = vmatpush.msra.mxu0 %v464
  %531 = vmatpush.msra.mxu0 %v463
  %532 = vmatpush.msra.mxu0 %v462
  %533 = vmatpush.msra.mxu0 %v461
  %534 = vmatpush.msra.mxu0 %v460
  %535 = vmatpush.msra.mxu0 %v459
  %536 = vmatpush.msra.mxu0 %v458
  %537 = vmatpush.msra.mxu0 %v457
  %538 = vmatpush.msra.mxu0 %v456
  %539 = vmatpush.msra.mxu0 %v455
  %540 = vmatpush.msra.mxu0 %v454
  %541 = vmatpush.msra.mxu0 %v453
  %542 = vmatpush.msra.mxu0 %v452
  %543 = vmatpush.msra.mxu0 %v451
  %544 = vmatpush.msra.mxu0 %v450
  %545 = vmatmul.f32.gmra.mxu0 %v528
  %v546 = vpop.f32.mrf.mxu0
  %v547 = vadd.f32 0.0, %v546
  %548 = vdwg.mxu0
  %v549 = vadd.f32 %v527, %v547
  %v550 = vld [vmem:[%s10] sm:$0x1]
  %v552 = vperm.slane %v550, 0
  %v554 = vadd.f32 %v549, %v552
  %v555 = vmul.f32 %v554, %v554
  %v556 = vmul.f32 %v554, %v555
  %v557 = vmul.f32 %v556, 0.044715
  %v558 = vadd.f32 %v554, %v557
  %v559 = vmul.f32 %v558, 0.7978846
  %v560 = vtanh.pop %v559
  %v561 = vadd.f32 %v560, 1.0
  %v562 = vmul.f32 %v561, 0.5
  %v563 = vmul.f32 %v554, %v562
  %v564 = vld [vmem:[%s11] sm:$0x1]
  %v566 = vperm.slane %v564, 0
  %v568 = vmul.f32 %v563, %v566
  %569 = vadd.xlane.f32.xlu0 %v568
  %v570 = vpop.xlane.xlu0 %569
  %v571 = vld [vmem:[%s3] sm:$0xff]
  %v572 = vld [vmem:[%s3 + $0x8] sm:$0xff]
  %v573 = vld [vmem:[%s3 + $0x10] sm:$0xff]
  %v574 = vld [vmem:[%s3 + $0x18] sm:$0xff]
  %v575 = vld [vmem:[%s3 + $0x20] sm:$0xff]
  %v576 = vld [vmem:[%s3 + $0x28] sm:$0xff]
  %v577 = vld [vmem:[%s3 + $0x30] sm:$0xff]
  %v578 = vld [vmem:[%s3 + $0x38] sm:$0xff]
  %v579 = vrot.slane %v571, 4
  %v580 = vadd.f32 %v571, %v579
  %v581 = vrot.slane %v580, 2
  %v582 = vadd.f32 %v580, %v581
  %v583 = vrot.slane %v582, 1
  %v584 = vadd.f32 %v582, %v583
  %v585 = vrot.slane %v572, 4
  %v586 = vadd.f32 %v572, %v585
  %v587 = vrot.slane %v586, 2
  %v588 = vadd.f32 %v586, %v587
  %v589 = vrot.slane %v588, 1
  %v590 = vadd.f32 %v588, %v589
  %v591 = vrot.slane %v573, 4
  %v592 = vadd.f32 %v573, %v591
  %v593 = vrot.slane %v592, 2
  %v594 = vadd.f32 %v592, %v593
  %v595 = vrot.slane %v594, 1
  %v596 = vadd.f32 %v594, %v595
  %v597 = vrot.slane %v574, 4
  %v598 = vadd.f32 %v574, %v597
  %v599 = vrot.slane %v598, 2
  %v600 = vadd.f32 %v598, %v599
  %v601 = vrot.slane %v600, 1
  %v602 = vadd.f32 %v600, %v601
  %v603 = vrot.slane %v575, 4
  %v604 = vadd.f32 %v575, %v603
  %v605 = vrot.slane %v604, 2
  %v606 = vadd.f32 %v604, %v605
  %v607 = vrot.slane %v606, 1
  %v608 = vadd.f32 %v606, %v607
  %v609 = vrot.slane %v576, 4
  %v610 = vadd.f32 %v576, %v609
  %v611 = vrot.slane %v610, 2
  %v612 = vadd.f32 %v610, %v611
  %v613 = vrot.slane %v612, 1
  %v614 = vadd.f32 %v612, %v613
  %v615 = vrot.slane %v577, 4
  %v616 = vadd.f32 %v577, %v615
  %v617 = vrot.slane %v616, 2
  %v618 = vadd.f32 %v616, %v617
  %v619 = vrot.slane %v618, 1
  %v620 = vadd.f32 %v618, %v619
  %v621 = vrot.slane %v578, 4
  %v622 = vadd.f32 %v578, %v621
  %v623 = vrot.slane %v622, 2
  %v624 = vadd.f32 %v622, %v623
  %v625 = vrot.slane %v624, 1
  %v626 = vadd.f32 %v624, %v625
  %v627 = vrcp.pop 8.0
  %v628 = vmul.f32 8.0, %v627
  %v629 = vsub.f32 1.0, %v628
  %v630 = vmul.f32 %v627, %v629
  %v631 = vadd.f32 %v627, %v630
  %vm632 = vweird.f32 %v627
  %v633 = vsel %vm632, %v627, %v631
  %v634 = vmul.f32 %v584, %v633
  %v635 = vmul.f32 %v590, %v633
  %v636 = vmul.f32 %v596, %v633
  %v637 = vmul.f32 %v602, %v633
  %v638 = vmul.f32 %v608, %v633
  %v639 = vmul.f32 %v614, %v633
  %v640 = vmul.f32 %v620, %v633
  %v641 = vmul.f32 %v626, %v633
  %v642 = vld [vmem:[%s12] sm:$0xff]
  %v643 = vld [vmem:[%s12 + $0x8] sm:$0xff]
  %v644 = vld [vmem:[%s12 + $0x10] sm:$0xff]
  %v645 = vld [vmem:[%s12 + $0x18] sm:$0xff]
  %v646 = vld [vmem:[%s12 + $0x20] sm:$0xff]
  %v647 = vld [vmem:[%s12 + $0x28] sm:$0xff]
  %v648 = vld [vmem:[%s12 + $0x30] sm:$0xff]
  %v649 = vld [vmem:[%s12 + $0x38] sm:$0xff]
  %v650 = vld [vmem:[%s12 + $0x40] sm:$0xff]
  %v651 = vld [vmem:[%s12 + $0x48] sm:$0xff]
  %v652 = vld [vmem:[%s12 + $0x50] sm:$0xff]
  %v653 = vld [vmem:[%s12 + $0x58] sm:$0xff]
  %v654 = vld [vmem:[%s12 + $0x60] sm:$0xff]
  %v655 = vld [vmem:[%s12 + $0x68] sm:$0xff]
  %v656 = vld [vmem:[%s12 + $0x70] sm:$0xff]
  %v657 = vld [vmem:[%s12 + $0x78] sm:$0xff]
  %v658 = vld [vmem:[%s13] sm:$0x1]
  %v660 = vperm.slane %v658, 0
  %vm670 = vcmask 1041409
  %v671 = vsel %vm670, %v635, %v634
  %vm672 = vcmask 1042434
  %v673 = vsel %vm672, %v636, %v671
  %vm674 = vcmask 1043459
  %v675 = vsel %vm674, %v637, %v673
  %vm676 = vcmask 1044484
  %v677 = vsel %vm676, %v638, %v675
  %vm678 = vcmask 1045509
  %v679 = vsel %vm678, %v639, %v677
  %vm680 = vcmask 1046534
  %v681 = vsel %vm680, %v640, %v679
  %vm682 = vcmask 1047559
  %v683 = vsel %vm682, %v641, %v681
  %685 = vmatpush.msra.mxu0 %v657
  %686 = vmatpush.msra.mxu0 %v656
  %687 = vmatpush.msra.mxu0 %v655
  %688 = vmatpush.msra.mxu0 %v654
  %689 = vmatpush.msra.mxu0 %v653
  %690 = vmatpush.msra.mxu0 %v652
  %691 = vmatpush.msra.mxu0 %v651
  %692 = vmatpush.msra.mxu0 %v650
  %693 = vmatpush.msra.mxu0 %v649
  %694 = vmatpush.msra.mxu0 %v648
  %695 = vmatpush.msra.mxu0 %v647
  %696 = vmatpush.msra.mxu0 %v646
  %697 = vmatpush.msra.mxu0 %v645
  %698 = vmatpush.msra.mxu0 %v644
  %699 = vmatpush.msra.mxu0 %v643
  %700 = vmatpush.msra.mxu0 %v642
  %701 = vmatmul.f32.gmra.mxu0 %v683
  %v702 = vpop.f32.mrf.mxu0
  %v703 = vadd.f32 %v660, %v702
  %704 = vdwg.mxu0
  %v705 = vmul.f32 %v344, %v703
  %v706 = vld [vmem:[%s14] sm:$0xff]
  %v707 = vld [vmem:[%s14 + $0x8] sm:$0xff]
  %v708 = vld [vmem:[%s14 + $0x10] sm:$0xff]
  %v709 = vld [vmem:[%s14 + $0x18] sm:$0xff]
  %v710 = vld [vmem:[%s14 + $0x20] sm:$0xff]
  %v711 = vld [vmem:[%s14 + $0x28] sm:$0xff]
  %v712 = vld [vmem:[%s14 + $0x30] sm:$0xff]
  %v713 = vld [vmem:[%s14 + $0x38] sm:$0xff]
  %v714 = vld [vmem:[%s14 + $0x40] sm:$0xff]
  %v715 = vld [vmem:[%s14 + $0x48] sm:$0xff]
  %v716 = vld [vmem:[%s14 + $0x50] sm:$0xff]
  %v717 = vld [vmem:[%s14 + $0x58] sm:$0xff]
  %v718 = vld [vmem:[%s14 + $0x60] sm:$0xff]
  %v719 = vld [vmem:[%s14 + $0x68] sm:$0xff]
  %v720 = vld [vmem:[%s14 + $0x70] sm:$0xff]
  %v721 = vld [vmem:[%s14 + $0x78] sm:$0xff]
  %v722 = vld [vmem:[%s15] sm:$0x1]
  %v724 = vperm.slane %v722, 0
  %726 = vmatpush.msra.mxu0 %v721
  %727 = vmatpush.msra.mxu0 %v720
  %728 = vmatpush.msra.mxu0 %v719
  %729 = vmatpush.msra.mxu0 %v718
  %730 = vmatpush.msra.mxu0 %v717
  %731 = vmatpush.msra.mxu0 %v716
  %732 = vmatpush.msra.mxu0 %v715
  %733 = vmatpush.msra.mxu0 %v714
  %734 = vmatpush.msra.mxu0 %v713
  %735 = vmatpush.msra.mxu0 %v712
  %736 = vmatpush.msra.mxu0 %v711
  %737 = vmatpush.msra.mxu0 %v710
  %738 = vmatpush.msra.mxu0 %v709
  %739 = vmatpush.msra.mxu0 %v708
  %740 = vmatpush.msra.mxu0 %v707
  %741 = vmatpush.msra.mxu0 %v706
  %742 = vmatmul.f32.gmra.mxu0 %v705
  %v743 = vpop.f32.mrf.mxu0
  %v744 = vadd.f32 %v724, %v743
  %745 = vdwg.mxu0
  %v746 = vmul.f32 %v744, %v744
  %v747 = vmul.f32 %v744, %v746
  %v748 = vmul.f32 %v747, 0.044715
  %v749 = vadd.f32 %v744, %v748
  %v750 = vmul.f32 %v749, 0.7978846
  %v751 = vtanh.pop %v750
  %v752 = vadd.f32 %v751, 1.0
  %v753 = vmul.f32 %v752, 0.5
  %v754 = vmul.f32 %v744, %v753
  %v755 = vld [vmem:[%s16] sm:$0x1]
  %v757 = vperm.slane %v755, 0
  %v759 = vmul.f32 %v754, %v757
  %760 = vadd.xlane.f32.xlu0 %v759
  %v761 = vpop.xlane.xlu0 %760
  %v762 = vlaneseq
  %v763 = vand.u32 %v762, 127
  %vm764 = vcmp.eq.s32.totalorder %v763, 0
  %v765 = vsel %vm764, %v401, 0.0
  %vm766 = vcmp.eq.s32.totalorder %v763, 1
  %v767 = vsel %vm766, %v570, 0.0
  %v768 = vadd.f32 %v765, %v767
  %vm769 = vcmp.eq.s32.totalorder %v763, 2
  %v770 = vsel %vm769, %v761, 0.0
  %v771 = vadd.f32 %v768, %v770
  %vm772 = vcmp.eq.s32.totalorder %v763, 3
  %v773 = vadd.f32 %v401, %v570
  %v774 = vadd.f32 %v773, %v761
  %v775 = vsel %vm772, %v774, 0.0
  %v776 = vadd.f32 %v771, %v775
  %v777 = vld [vmem:[%s17] sm:$0x1]
  %v779 = vperm.slane %v777, 0
  %v781 = vadd.f32 %v776, %v779
  %782 = vst [vmem:[%s18] sm:$0xff] %v781
  // Predicated region
  $region74: #{_lambda_.1} parent=0 // pred_check
    _
  $region75: #{_lambda_.1} parent=0 // pred_check_branch
    %784 = sbr.rel (0) target = $region77
  $region76: #{_lambda_.1} parent=0 // pred_region
    _
  $region77: #{_lambda_.1} parent=0 // pred_fallthru
    _
  // Predicated region
  $region78: #{_lambda_.1} parent=0 // pred_check
    _
  $region79: #{_lambda_.1} parent=0 // pred_check_branch
    %786 = sbr.rel (0) target = $region81
  $region80: #{_lambda_.1} parent=0 // pred_region
    _
  $region81: #{_lambda_.1} parent=0 // pred_fallthru
    _

</llo_original>
